<compile_context>
chip_gen: v6e
topology: v6e:2x2x1
jax: 0.10.0
libtpu: 0.0.40
codegen_flags: <defaults>
</compile_context>

<pallas_src>
import functools

import jax
import jax.numpy as jnp
from jax.experimental import pallas as pl
from jax.experimental.pallas import tpu as pltpu


def _round_up(x, m):
    return ((x + m - 1) // m) * m


def _cdiv(a, b):
    return -(-a // b)


def _pick_tile(dim, max_tile, granule):
    """(tile, padded) with tile<=max_tile, tile%granule==0, minimal padding."""
    min_pad = _round_up(dim, granule)
    if min_pad <= max_tile:
        return min_pad, min_pad
    best = None
    n = _cdiv(dim, max_tile)
    for _ in range(8):
        tile = _round_up(_cdiv(dim, n), granule)
        padded = n * tile
        if best is None or padded < best[1]:
            best = (tile, padded)
        if padded == min_pad:
            break
        n += 1
    return best


def _vmem_limit_bytes(requested=64 * 1024 * 1024):
    """Generation-aware scoped-VMEM budget (v7x has only 64 MiB physical)."""
    try:
        cap = int(pltpu.get_tpu_info().vmem_capacity_bytes)
    except Exception:  # pragma: no cover - info query unavailable
        return 48 * 1024 * 1024
    return int(max(32 * 1024 * 1024, min(requested, cap - 16 * 1024 * 1024)))


def _euclidean_deconf_kernel(x_ref, w_ref, xsq_ref, wsq_ref, o_ref, acc_ref,
                             *, inv_f, mxu_dtype):
    k = pl.program_id(2)

    @pl.when(k == 0)
    def _():
        acc_ref[...] = jnp.zeros_like(acc_ref)

    # x @ W^T slab on the MXU (W already stored pre-transposed as (F, C)).
    acc_ref[...] += jnp.dot(
        x_ref[...].astype(mxu_dtype), w_ref[...].astype(mxu_dtype),
        preferred_element_type=jnp.float32)                     # (tm, tn) f32

    @pl.when(k == pl.num_programs(2) - 1)
    def _():
        # ret = (2/F) x.w - ||x||^2/F - ||w||^2/F ; xsq/wsq are pre-scaled.
        o_ref[...] = (acc_ref[...] * (2.0 * inv_f)
                      - xsq_ref[...]
                      - wsq_ref[...]).astype(o_ref.dtype)


def prepare_weights(weight, *, tn_max=512, tk_max=1024,
                    mxu_dtype=jnp.bfloat16):
    """One-time, weight-stationary prep: transpose, pad, cast, ||w||^2/F."""
    weight = jnp.asarray(weight, jnp.float32)
    C, F = weight.shape
    tn, Cp = _pick_tile(C, tn_max, 128)
    tk, Fp = _pick_tile(F, tk_max, 128)
    inv_f = 1.0 / F                      # ORIGINAL feature count, not padded

    wsq = (jnp.sum(weight * weight, axis=1) * inv_f)[None, :]   # (1, C) f32
    if Cp != C:
        wsq = jnp.pad(wsq, ((0, 0), (0, Cp - C)))

    w_t = weight.T                                               # (F, C)
    if (Fp, Cp) != (F, C):
        w_t = jnp.pad(w_t, ((0, Fp - F), (0, Cp - C)))
    w_t = w_t.astype(mxu_dtype)

    return dict(wT=w_t, wsq=wsq, C=C, F=F, Cp=Cp, Fp=Fp, tn=tn, tk=tk,
                inv_f=inv_f, mxu_dtype=mxu_dtype)


def euclidean_deconf_forward(x, prep, *, tm_max=512, input_buffer_count=None):
    """x: (B, F) -> (B, C) using a cached prepare_weights() struct."""
    x = jnp.asarray(x, jnp.float32)
    B, F = x.shape
    assert F == prep["F"], "feature dim mismatch with prepared weights"

    Cp, Fp, tn, tk = prep["Cp"], prep["Fp"], prep["tn"], prep["tk"]
    inv_f = prep["inv_f"]
    tm, Bp = _pick_tile(B, tm_max, 8)

    # Best effort for v7x megacore: give the parallel grid axes >=2 tiles.
    # (No-op cost on v5e/v6e: extra steps/reads are negligible at these sizes.)
    if (Bp // tm) * (Cp // tn) < 2:
        if Bp // 8 >= 2:                       # prefer splitting the batch axis
            tm = 8 * _cdiv(Bp // 8, 2)
            while Bp % tm:
                tm -= 8
        elif Cp // 128 >= 2:
            tn = 128 * _cdiv(Cp // 128, 2)
            while Cp % tn:
                tn -= 128

    if (Bp, Fp) != (B, F):
        x = jnp.pad(x, ((0, Bp - B), (0, Fp - F)))

    # ||x||^2 / F, once per call (padded rows/cols are zero -> contribute 0).
    xsq = jnp.sum(x * x, axis=1, keepdims=True) * inv_f          # (Bp, 1) f32

    kernel = functools.partial(_euclidean_deconf_kernel,
                               inv_f=inv_f, mxu_dtype=prep["mxu_dtype"])

    def _io_spec(shape, index_map):
        # Optional deeper input pipelining (e.g. Buffered(3) on v5e where the
        # kernel is most often DMA-exposed).  Default: standard double-buffer.
        if input_buffer_count is None:
            return pl.BlockSpec(shape, index_map)
        return pl.BlockSpec(shape, index_map,
                            pipeline_mode=pl.Buffered(input_buffer_count))

    out = pl.pallas_call(
        kernel,
        out_shape=jax.ShapeDtypeStruct((Bp, Cp), jnp.float32),
        grid_spec=pltpu.PrefetchScalarGridSpec(
            num_scalar_prefetch=0,
            grid=(Bp // tm, Cp // tn, Fp // tk),       # reduction (F) axis last
            in_specs=[
                _io_spec((tm, tk), lambda i, j, k: (i, k)),       # x tile
                _io_spec((tk, tn), lambda i, j, k: (k, j)),       # W^T tile
                pl.BlockSpec((tm, 1), lambda i, j, k: (i, 0)),    # ||x||^2/F
                pl.BlockSpec((1, tn), lambda i, j, k: (0, j)),    # ||w||^2/F
            ],
            out_specs=pl.BlockSpec((tm, tn), lambda i, j, k: (i, j)),
            scratch_shapes=[pltpu.VMEM((tm, tn), jnp.float32)],   # accumulator
        ),
        compiler_params=pltpu.CompilerParams(
            dimension_semantics=("parallel", "parallel", "arbitrary"),
            vmem_limit_bytes=_vmem_limit_bytes(),
        ),
    )(x, prep["wT"], xsq, prep["wsq"])

    return out[:B, :prep["C"]]


def make_euclidean_deconf(weight, *, mxu_dtype=jnp.bfloat16, **kwargs):
    """Cache all weight-stationary work; returns x -> (B, C) forward fn."""
    prep = prepare_weights(weight, mxu_dtype=mxu_dtype)
    return functools.partial(euclidean_deconf_forward, prep=prep, **kwargs)


def euclidean_deconf(x, weight, *, mxu_dtype=jnp.bfloat16, **kwargs):
    """Convenience one-shot wrapper (does NOT cache the weight prep)."""
    return euclidean_deconf_forward(
        x, prepare_weights(weight, mxu_dtype=mxu_dtype), **kwargs)


def _reference(x, weight):
    # Direct translation of the PyTorch forward for checking.
    x3 = x[:, :, None]                  # (B, F, 1)
    h = weight.T[None, :, :]            # (1, F, C)
    return -jnp.mean((x3 - h) ** 2, axis=1)


if __name__ == "__main__":
    key = jax.random.PRNGKey(0)
    kx, kw = jax.random.split(key)

    # --- Small shapes matching the module / test harness -------------------
    batch = 2
    in_features = 32
    num_classes = 16

    x = jax.random.normal(kx, (batch, in_features), dtype=jnp.float32)

    # Kaiming normal init (nonlinearity='relu', fan_in = in_features).
    std = (2.0 / in_features) ** 0.5
    weight = std * jax.random.normal(kw, (num_classes, in_features),
                                     dtype=jnp.float32)

    ref = _reference(x, weight)

    # Default bf16-MXU path.
    fwd = make_euclidean_deconf(weight)
    out = jax.block_until_ready(fwd(x))
    assert out.shape == (batch, num_classes)
    assert jnp.allclose(out, ref, atol=2e-2, rtol=2e-2), "bf16 mismatch"

    # f32-MXU precision path.
    out_f32 = jax.block_until_ready(
        euclidean_deconf(x, weight, mxu_dtype=jnp.float32))
    assert jnp.allclose(out_f32, ref, atol=1e-4, rtol=1e-4), "f32 mismatch"

    # --- Larger check: multi-tile (i, k) grid, padding on B and C ----------
    kx2, kw2 = jax.random.split(jax.random.PRNGKey(1))
    B2, F2, C2 = 270, 1152, 264
    x2 = jax.random.normal(kx2, (B2, F2), dtype=jnp.float32)
    w2 = (2.0 / F2) ** 0.5 * jax.random.normal(kw2, (C2, F2), dtype=jnp.float32)
    ref2 = _reference(x2, w2)

    out2 = jax.block_until_ready(euclidean_deconf(x2, w2))      # bf16 default
    assert out2.shape == (B2, C2)
    assert jnp.allclose(out2, ref2, atol=2e-2, rtol=2e-2), "tiled bf16 mismatch"

    out2_f32 = jax.block_until_ready(
        euclidean_deconf(x2, w2, mxu_dtype=jnp.float32))
    assert jnp.allclose(out2_f32, ref2, atol=1e-3, rtol=1e-3), "tiled f32 mismatch"

    print("KERNEL_OK")
</pallas_src>

<mosaic_0001>
module attributes {stable_mosaic.version = 11 : i64} {
  func.func @_euclidean_deconf_kernel(%arg0: i32, %arg1: i32, %arg2: i32, %arg3: memref<8x128xf32, #tpu.memory_space<vmem>>, %arg4: memref<128x128xbf16, #tpu.memory_space<vmem>>, %arg5: memref<8x1xf32, #tpu.memory_space<vmem>>, %arg6: memref<1x128xf32, #tpu.memory_space<vmem>>, %arg7: memref<8x128xf32, #tpu.memory_space<vmem>>, %arg8: memref<8x128xf32, #tpu.memory_space<vmem>>) attributes {dimension_semantics = [#tpu.dimension_semantics<parallel>, #tpu.dimension_semantics<parallel>, #tpu.dimension_semantics<arbitrary>], iteration_bounds = array<i64: 1, 1, 1>, scalar_prefetch = 0 : i64, scratch_operands = 1 : i64, tpu.core_type = #tpu.core_type<tc>, window_params = [{transform_indices = @transform_0, window_bounds = array<i64: 8, 128>}, {transform_indices = @transform_1, window_bounds = array<i64: 128, 128>}, {transform_indices = @transform_2, window_bounds = array<i64: 8, 1>}, {transform_indices = @transform_3, window_bounds = array<i64: 1, 128>}, {transform_indices = @transform_4, window_bounds = array<i64: 8, 128>}]} {
    %c0_i32 = arith.constant 0 : i32
    %0 = arith.cmpi eq, %arg2, %c0_i32 : i32
    %1 = arith.extui %0 : i1 to i32
    %c0_i32_0 = arith.constant 0 : i32
    %2 = arith.cmpi ne, %1, %c0_i32_0 : i32
    scf.if %2 {
      %cst_10 = arith.constant 0.000000e+00 : f32
      %13 = vector.broadcast %cst_10 : f32 to vector<8x128xf32>
      %c0_11 = arith.constant 0 : index
      %c0_12 = arith.constant 0 : index
      %14 = vector.load %arg8[%c0_11, %c0_12] : memref<8x128xf32, #tpu.memory_space<vmem>>, vector<8x128xf32>
      tpu.vector_store %arg8[%c0_11, %c0_12], %13 {strides = array<i32>} : memref<8x128xf32, #tpu.memory_space<vmem>>, vector<8x128xf32>,
    } else {
    }
    %c0 = arith.constant 0 : index
    %c0_1 = arith.constant 0 : index
    %3 = vector.load %arg8[%c0, %c0_1] : memref<8x128xf32, #tpu.memory_space<vmem>>, vector<8x128xf32>
    %c0_2 = arith.constant 0 : index
    %c0_3 = arith.constant 0 : index
    %4 = vector.load %arg3[%c0_2, %c0_3] : memref<8x128xf32, #tpu.memory_space<vmem>>, vector<8x128xf32>
    %5 = arith.truncf %4 : vector<8x128xf32> to vector<8x128xbf16>
    %c0_4 = arith.constant 0 : index
    %c0_5 = arith.constant 0 : index
    %6 = vector.load %arg4[%c0_4, %c0_5] : memref<128x128xbf16, #tpu.memory_space<vmem>>, vector<128x128xbf16>
    %cst = arith.constant dense<0.000000e+00> : vector<8x128xf32>
    %7 = tpu.matmul %5, %6, %cst {dimension_numbers = #tpu.dot_dimension_numbers<[1], [0], [0], [1], [0, 0, 1, 1], [], []>} : vector<8x128xbf16>, vector<128x128xbf16>, vector<8x128xf32> -> vector<8x128xf32>
    %8 = arith.addf %3, %7 : vector<8x128xf32>
    %c0_6 = arith.constant 0 : index
    %c0_7 = arith.constant 0 : index
    %9 = vector.load %arg8[%c0_6, %c0_7] : memref<8x128xf32, #tpu.memory_space<vmem>>, vector<8x128xf32>
    tpu.vector_store %arg8[%c0_6, %c0_7], %8 {strides = array<i32>} : memref<8x128xf32, #tpu.memory_space<vmem>>, vector<8x128xf32>,
    %c0_i32_8 = arith.constant 0 : i32
    %10 = arith.cmpi eq, %arg2, %c0_i32_8 : i32
    %11 = arith.extui %10 : i1 to i32
    %c0_i32_9 = arith.constant 0 : i32
    %12 = arith.cmpi ne, %11, %c0_i32_9 : i32
    scf.if %12 {
      %c0_10 = arith.constant 0 : index
      %c0_11 = arith.constant 0 : index
      %13 = vector.load %arg8[%c0_10, %c0_11] : memref<8x128xf32, #tpu.memory_space<vmem>>, vector<8x128xf32>
      %cst_12 = arith.constant 6.250000e-02 : f32
      %14 = vector.broadcast %cst_12 : f32 to vector<8x128xf32>
      %15 = arith.mulf %13, %14 : vector<8x128xf32>
      %c0_13 = arith.constant 0 : index
      %c0_14 = arith.constant 0 : index
      %16 = vector.load %arg5[%c0_13, %c0_14] : memref<8x1xf32, #tpu.memory_space<vmem>>, vector<8x1xf32>
      %17 = vector.broadcast %16 : vector<8x1xf32> to vector<8x128xf32>
      %18 = arith.subf %15, %17 : vector<8x128xf32>
      %c0_15 = arith.constant 0 : index
      %c0_16 = arith.constant 0 : index
      %19 = vector.load %arg6[%c0_15, %c0_16] : memref<1x128xf32, #tpu.memory_space<vmem>>, vector<1x128xf32>
      %20 = vector.broadcast %19 : vector<1x128xf32> to vector<8x128xf32>
      %21 = arith.subf %18, %20 : vector<8x128xf32>
      %c0_17 = arith.constant 0 : index
      %c0_18 = arith.constant 0 : index
      %22 = vector.load %arg7[%c0_17, %c0_18] : memref<8x128xf32, #tpu.memory_space<vmem>>, vector<8x128xf32>
      tpu.vector_store %arg7[%c0_17, %c0_18], %21 {strides = array<i32>} : memref<8x128xf32, #tpu.memory_space<vmem>>, vector<8x128xf32>,
    } else {
    }
    return
  }
  func.func @transform_0(%arg0: i32, %arg1: i32, %arg2: i32) -> (i32, i32) {
    %c0_i32 = arith.constant 0 : i32
    return %arg0, %arg2 : i32, i32
  }
  func.func @transform_1(%arg0: i32, %arg1: i32, %arg2: i32) -> (i32, i32) {
    %c0_i32 = arith.constant 0 : i32
    return %arg2, %arg1 : i32, i32
  }
  func.func @transform_2(%arg0: i32, %arg1: i32, %arg2: i32) -> (i32, i32) {
    %c0_i32 = arith.constant 0 : i32
    %c0_i32_0 = arith.constant 0 : i32
    return %arg0, %c0_i32 : i32, i32
  }
  func.func @transform_3(%arg0: i32, %arg1: i32, %arg2: i32) -> (i32, i32) {
    %c0_i32 = arith.constant 0 : i32
    %c0_i32_0 = arith.constant 0 : i32
    return %c0_i32, %arg1 : i32, i32
  }
  func.func @transform_4(%arg0: i32, %arg1: i32, %arg2: i32) -> (i32, i32) {
    %c0_i32 = arith.constant 0 : i32
    return %arg0, %arg1 : i32, i32
  }
}

</mosaic_0001>

<llo_original>
// kernel: tpu_custom_call.1
$region0: #{tpu_custom_call.1}
  #allocation0 [shape = 'u32[]', space=smem, size = 0x4, offset = 0x4, fixed_abs, tag = 'smem constant byte address 0x4 - core index']
  #allocation1 [shape = 'u32[144,128]{1,0:T(1,128)}', space=vmem, size = 0x12000, scoped, tag = 'internal scratch']
  #allocation2 [shape = 'f32[8,128]{1,0:T(8,128)}', space=vmem, size = 0x1000, scoped, tag = 'scratch operand']
  %s0 = inlined_call_operand.vmem [shape: f32[8,128], index: 0, kind: input, shape index: {}]
  %s1 = inlined_call_operand.hbm [shape: bf16[128,128], index: 1, kind: input, shape index: {}]
  %s2 = inlined_call_operand.vmem [shape: f32[8,1], index: 2, kind: input, shape index: {}]
  %s3 = inlined_call_operand.vmem [shape: f32[1,128], index: 3, kind: input, shape index: {}]
  %s4 = inlined_call_operand.hbm [shape: f32[8,128], index: 4, kind: output, shape index: {}]
  %s5 = sld [smem:[#allocation0]]
  $region38: #{tpu_custom_call.1} parent=0
    _
  %s7 = ssub.s32 1, %s5
  %s8 = scalar_select 0, %s7, %s5
  $region1: #{tpu_custom_call.1} parent=0
    #allocation3 [shape = 'u8[32768]{0}', space=vmem, size = 0x8000, scoped, tag = 'input window, operand 1, single buffered']
    #allocation4 [shape = 's32[1]{0}', space=sflag, size = 0x4, scoped, tag = 'scoped memory for tpu_custom_call.1']
    #allocation5 [shape = 's32[1]{0}', space=sflag, size = 0x4, scoped, tag = 'scoped memory for tpu_custom_call.1']
    #allocation6 [shape = 'u8[4096]{0}', space=vmem, size = 0x1000, scoped, tag = 'output window, operand 0, single buffered']
    %9 = vsyncpa [#allocation4], 0
    %10 = vsyncpa [#allocation5], 0
    // Predicated region
    $region2: #{tpu_custom_call.1} parent=1 // pred_check
      _
    $region3: #{tpu_custom_call.1} parent=1 // pred_check_branch
      %12 = sbr.rel (0) target = $region5
    $region4: #{tpu_custom_call.1} parent=1 // pred_region
      _
    $region5: #{tpu_custom_call.1} parent=1 // pred_fallthru
      _
    // Predicated region
    $region6: #{tpu_custom_call.1} parent=1 // pred_check
      _
    $region7: #{tpu_custom_call.1} parent=1 // pred_check_branch
      %14 = sbr.rel (0) target = $region9
    $region8: #{tpu_custom_call.1} parent=1 // pred_region
      %s16 = ssub.s32 1024, 1024
      %17 = vsyncadd [#allocation4], %s16
      %s18 = sshll.u32 [#allocation3], 4
      %s19 = int_to_ptr.vmem [resolvable:$true] %s18
      %24 = dma.hbm_to_vmem [thread:$0]  %s1, 1024, %s19, [#allocation4], 64, 64, 4
    $region9: #{tpu_custom_call.1} parent=1 // pred_fallthru
      _
    // Predicated region
    $region10: #{tpu_custom_call.1} parent=1 // pred_check
      _
    $region11: #{tpu_custom_call.1} parent=1 // pred_check_branch
      %26 = sbr.rel (0) target = $region13
    $region12: #{tpu_custom_call.1} parent=1 // pred_region
      _
    $region13: #{tpu_custom_call.1} parent=1 // pred_fallthru
      _
    // Predicated region
    $region14: #{tpu_custom_call.1} parent=1 // pred_check
      _
    $region15: #{tpu_custom_call.1} parent=1 // pred_check_branch
      %28 = sbr.rel (0) target = $region17
    $region16: #{tpu_custom_call.1} parent=1 // pred_region
      _
    $region17: #{tpu_custom_call.1} parent=1 // pred_fallthru
      _
    // Predicated region
    $region18: #{tpu_custom_call.1} parent=1 // pred_check
      _
    $region19: #{tpu_custom_call.1} parent=1 // pred_check_branch
      %30 = sbr.rel (0) target = $region21
    $region20: #{tpu_custom_call.1} parent=1 // pred_region
      %31 = dma.done [#allocation4], 1024
    $region21: #{tpu_custom_call.1} parent=1 // pred_fallthru
      _
    %p33 = scmp.eq.s32.totalorder 0, 0
    // Predicated region
    $region22: #{tpu_custom_call.1} parent=1 // pred_check
      %p34 = pneg %p33
    $region23: #{tpu_custom_call.1} parent=1 // pred_check_branch
      %36 = sbr.rel (%p34) target = $region25
    $region24: #{tpu_custom_call.1} parent=1 // pred_region
      %37 = vst [vmem:[#allocation2] sm:$0xff] 0.0
    $region25: #{tpu_custom_call.1} parent=1 // pred_fallthru
      _
    %v38 = vld [vmem:[#allocation2] sm:$0xff]
    %v39 = vld [vmem:[%s0] sm:$0xff]
    %v40 = vpack.c.bf16 %v39, %v39
    %v41 = vld [vmem:[#allocation3] sm:$0xf]
    %v42 = vld [vmem:[#allocation3 + $0x4] sm:$0xf]
    %v43 = vld [vmem:[#allocation3 + $0x8] sm:$0xf]
    %v44 = vld [vmem:[#allocation3 + $0xc] sm:$0xf]
    %v45 = vld [vmem:[#allocation3 + $0x10] sm:$0xf]
    %v46 = vld [vmem:[#allocation3 + $0x14] sm:$0xf]
    %v47 = vld [vmem:[#allocation3 + $0x18] sm:$0xf]
    %v48 = vld [vmem:[#allocation3 + $0x1c] sm:$0xf]
    %v49 = vld [vmem:[#allocation3 + $0x20] sm:$0xf]
    %v50 = vld [vmem:[#allocation3 + $0x24] sm:$0xf]
    %v51 = vld [vmem:[#allocation3 + $0x28] sm:$0xf]
    %v52 = vld [vmem:[#allocation3 + $0x2c] sm:$0xf]
    %v53 = vld [vmem:[#allocation3 + $0x30] sm:$0xf]
    %v54 = vld [vmem:[#allocation3 + $0x34] sm:$0xf]
    %v55 = vld [vmem:[#allocation3 + $0x38] sm:$0xf]
    %v56 = vld [vmem:[#allocation3 + $0x3c] sm:$0xf]
    %v73 = vunpack.c.l.b16 %v41
    %v74 = vunpack.c.l.b16 %v42
    %v75 = vunpack.c.l.b16 %v43
    %v76 = vunpack.c.l.b16 %v44
    %v77 = vunpack.c.l.b16 %v45
    %v78 = vunpack.c.l.b16 %v46
    %v79 = vunpack.c.l.b16 %v47
    %v80 = vunpack.c.l.b16 %v48
    %v81 = vunpack.c.l.b16 %v49
    %v82 = vunpack.c.l.b16 %v50
    %v83 = vunpack.c.l.b16 %v51
    %v84 = vunpack.c.l.b16 %v52
    %v85 = vunpack.c.l.b16 %v53
    %v86 = vunpack.c.l.b16 %v54
    %v87 = vunpack.c.l.b16 %v55
    %v88 = vunpack.c.l.b16 %v56
    %v89 = vpack.c.b16 %v74, %v73
    %v90 = vpack.c.b16 %v76, %v75
    %v91 = vpack.c.b16 %v78, %v77
    %v92 = vpack.c.b16 %v80, %v79
    %v93 = vpack.c.b16 %v82, %v81
    %v94 = vpack.c.b16 %v84, %v83
    %v95 = vpack.c.b16 %v86, %v85
    %v96 = vpack.c.b16 %v88, %v87
    %105 = vmatprep.subr.bf16.mxu0 0
    %106 = vmatpush1.bf16.msra.mxu0 %v96
    %107 = vmatprep.subr.bf16.mxu0 0
    %108 = vmatpush1.bf16.msra.mxu0 %v95
    %109 = vmatprep.subr.bf16.mxu0 0
    %110 = vmatpush1.bf16.msra.mxu0 %v94
    %111 = vmatprep.subr.bf16.mxu0 0
    %112 = vmatpush1.bf16.msra.mxu0 %v93
    %113 = vmatprep.subr.bf16.mxu0 0
    %114 = vmatpush1.bf16.msra.mxu0 %v92
    %115 = vmatprep.subr.bf16.mxu0 0
    %116 = vmatpush1.bf16.msra.mxu0 %v91
    %117 = vmatprep.subr.bf16.mxu0 0
    %118 = vmatpush1.bf16.msra.mxu0 %v90
    %119 = vmatprep.subr.bf16.mxu0 0
    %120 = vmatpush1.bf16.msra.mxu0 %v89
    %121 = vmatprep.subr.bf16.mxu0 0
    %122 = vmatpush2.bf16.msra.mxu0 0
    %123 = vmatprep.subr.bf16.mxu0 0
    %124 = vmatpush2.bf16.msra.mxu0 0
    %125 = vmatprep.subr.bf16.mxu0 0
    %126 = vmatpush2.bf16.msra.mxu0 0
    %127 = vmatprep.subr.bf16.mxu0 0
    %128 = vmatpush2.bf16.msra.mxu0 0
    %129 = vmatprep.subr.bf16.mxu0 0
    %130 = vmatpush2.bf16.msra.mxu0 0
    %131 = vmatprep.subr.bf16.mxu0 0
    %132 = vmatpush2.bf16.msra.mxu0 0
    %133 = vmatprep.subr.bf16.mxu0 0
    %134 = vmatpush2.bf16.msra.mxu0 0
    %135 = vmatprep.subr.bf16.mxu0 0
    %136 = vmatpush2.bf16.msra.mxu0 0
    %137 = vmatprep.mubr.bf16.mxu0 0
    %138 = vmatmul.mubr.bf16.gmra.mxu0 %v40
    %v139 = vpop.f32.mrf.mxu0
    %v140 = vadd.f32 0.0, %v139
    %v141 = vpop.f32.mrf.mxu0
    %v142 = vpop.f32.mrf.mxu0
    %v143 = vpop.f32.mrf.mxu0
    %144 = vdwg.mxu0
    %v145 = vadd.f32 %v38, %v140
    %146 = vst [vmem:[#allocation2] sm:$0xff] %v145
    // Predicated region
    $region26: #{tpu_custom_call.1} parent=1 // pred_check
      %p147 = pneg %p33
    $region27: #{tpu_custom_call.1} parent=1 // pred_check_branch
      %149 = sbr.rel (%p147) target = $region29
    $region28: #{tpu_custom_call.1} parent=1 // pred_region
      %v150 = vld [vmem:[#allocation2] sm:$0xff]
      %v151 = vmul.f32 %v150, 0.0625
      %v152 = vld [vmem:[%s2] sm:$0xff]
      %154 = vset.pattern.permute.xlu0 0
      %155 = vperm.xlu0 %154, %v152
      %v156 = vpop.permute.xlu0 %155
      %v158 = vsub.f32 %v151, %v156
      %v159 = vld [vmem:[%s3] sm:$0x1]
      %v161 = vlaneseq
      %v162 = vshrl.u32 %v161, 7
      %v163 = vsub.s32 0, %v162
      %v164 = vrot.slane %v159, %v163
      %v166 = vsub.f32 %v158, %v164
      %167 = vst [vmem:[#allocation6] sm:$0xff] %v166
    $region29: #{tpu_custom_call.1} parent=1 // pred_fallthru
      _
    // Predicated region
    $region30: #{tpu_custom_call.1} parent=1 // pred_check
      _
    $region31: #{tpu_custom_call.1} parent=1 // pred_check_branch
      %169 = sbr.rel (0) target = $region33
    $region32: #{tpu_custom_call.1} parent=1 // pred_region
      %s171 = ssub.s32 128, 128
      %172 = vsyncadd [#allocation5], %s171
      %s174 = sshll.u32 [#allocation6], 4
      %s175 = int_to_ptr.vmem [resolvable:$true] %s174
      %177 = dma.vmem_to_hbm [thread:$0]  %s175, 128, %s4, [#allocation5]
    $region33: #{tpu_custom_call.1} parent=1 // pred_fallthru
      _
    // Predicated region
    $region34: #{tpu_custom_call.1} parent=1 // pred_check
      _
    $region35: #{tpu_custom_call.1} parent=1 // pred_check_branch
      %179 = sbr.rel (0) target = $region37
    $region36: #{tpu_custom_call.1} parent=1 // pred_region
      %180 = dma.done [#allocation5], 128
    $region37: #{tpu_custom_call.1} parent=1 // pred_fallthru
      _
    %181 = vsyncpa [#allocation4], 1
    %182 = vsyncpa [#allocation5], 1

</llo_original>
